<compile_context>
chip_gen: v7x
topology: tpu7x:2x2x1
jax: 0.10.0
libtpu: 0.0.40
codegen_flags: <defaults>
</compile_context>

<pallas_src>
import functools

import jax
import jax.numpy as jnp
import numpy as np
from jax.experimental import pallas as pl
from jax.experimental.pallas import tpu as pltpu


def _round_up(x, m):
    return ((x + m - 1) // m) * m


# ----------------------------------------------------------------------------
# Kernel: tiled matmul, f32 accumulation directly into the output block.
# ----------------------------------------------------------------------------
def _dft_matmul_kernel(x_ref, w_ref, o_ref):
    # x_ref: (tm, tk) bf16   w_ref: (tk, tn) bf16   o_ref: (tm, tn) f32
    # The output BlockSpec ignores the k grid axis, so o_ref stays VMEM-resident
    # across the whole reduction -> it IS the accumulator.
    @pl.when(pl.program_id(2) == 0)
    def _init():
        o_ref[...] = jnp.zeros_like(o_ref)

    o_ref[...] += jnp.dot(
        x_ref[...], w_ref[...], preferred_element_type=jnp.float32
    )


# ----------------------------------------------------------------------------
# Cached fused [cos | -sin] DFT basis (built once per N, kept on device).
# ----------------------------------------------------------------------------
@functools.lru_cache(maxsize=16)
def _fused_dft_basis(N, half, K_pad, half_pad):
    n = np.arange(K_pad, dtype=np.int64)[:, None]
    k = np.arange(half_pad, dtype=np.int64)[None, :]
    # Exact modular reduction in int64 (no int32 overflow even for huge N),
    # float64 trig on host -- this runs once per N thanks to the lru_cache.
    m = (n * k) % np.int64(max(N, 1))
    ang = (2.0 * np.pi / max(N, 1)) * m.astype(np.float64)
    valid = ((n < N) & (k < half)).astype(np.float64)
    w = np.concatenate([np.cos(ang) * valid, -np.sin(ang) * valid], axis=1)
    # Transfer once, store as bf16 on device (f32 accumulation in the kernel).
    return jnp.asarray(w.astype(np.float32)).astype(jnp.bfloat16)


# ----------------------------------------------------------------------------
# Per-generation tile targets / VMEM limits (rooflines differ per chip).
# ----------------------------------------------------------------------------
def _chip_config():
    """Returns (tm_target, tn_target, tk_target, tm_floor, vmem_limit_bytes)."""
    try:
        kind = jax.devices()[0].device_kind.lower()
    except Exception:
        kind = ""
    if "v5 lite" in kind or "v5e" in kind or "v5litepod" in kind:
        # Crossover ~240 FLOP/B; scoped-VMEM default is only 16 MiB -> raise it.
        return 512, 512, 1024, 128, 64 * 1024 * 1024
    if "v7" in kind:
        # Reaches roofline at ~311 FLOP/B; only 64 MiB physical VMEM per TC.
        return 512, 1024, 2048, 256, 48 * 1024 * 1024
    if "v6" in kind:
        # Needs ~680 FLOP/B -> big output tiles + raised VMEM limit (128 MiB phys).
        return 1024, 2048, 2048, 256, 64 * 1024 * 1024
    # Unknown generation (v4/v5p/interpret): conservative mid-size tiles.
    return 512, 1024, 1024, 256, 64 * 1024 * 1024


def _pick_divisor_tile(total, target, step=128):
    """Largest multiple of `step` that divides `total` and is <= target (>= step)."""
    t = min(_round_up(target, step), total)
    t = max((t // step) * step, step)
    while t > step and total % t != 0:
        t -= step
    return t


def _pick_tm(B, target, floor):
    B8 = _round_up(B, 8)
    if B8 <= target:
        # Single row-block covering the whole batch, but at least `floor` rows
        # so the MXU isn't dominated by fill/drain for tiny B.
        return max(B8, min(floor, target))
    # Pick the multiple-of-128 tile <= target that wastes the least batch padding.
    best_tm, best_pad = 128, _round_up(B, 128)
    t = 256
    while t <= target:
        pad = _round_up(B, t)
        if pad <= best_pad:  # prefer larger tm on ties
            best_tm, best_pad = t, pad
        t += 128
    return best_tm


# ----------------------------------------------------------------------------
# Jitted runner (geometry is static).
# ----------------------------------------------------------------------------
@functools.partial(
    jax.jit,
    static_argnames=(
        "B_pad", "K_pad", "half", "half_pad", "tm", "tn", "tk", "vmem_limit",
    ),
)
def _fft_matmul(x, w, *, B_pad, K_pad, half, half_pad, tm, tn, tk, vmem_limit):
    B, N = x.shape
    W2 = 2 * half_pad
    x_p = jnp.pad(x.astype(jnp.bfloat16), ((0, B_pad - B), (0, K_pad - N)))
    grid = (B_pad // tm, W2 // tn, K_pad // tk)

    out = pl.pallas_call(
        _dft_matmul_kernel,
        out_shape=jax.ShapeDtypeStruct((B_pad, W2), jnp.float32),
        grid_spec=pltpu.PrefetchScalarGridSpec(
            num_scalar_prefetch=0,
            grid=grid,
            in_specs=[
                pl.BlockSpec((tm, tk), lambda i, j, k: (i, k)),
                # If profiling shows exposed DMA on the basis stream, add
                # pipeline_mode=pl.Buffered(3) here (costs one extra tk*tn buf).
                pl.BlockSpec((tk, tn), lambda i, j, k: (k, j)),
            ],
            out_specs=pl.BlockSpec((tm, tn), lambda i, j, k: (i, j)),
        ),
        compiler_params=pltpu.CompilerParams(
            dimension_semantics=("parallel", "parallel", "arbitrary"),
            vmem_limit_bytes=vmem_limit,
        ),
    )(x_p, w)

    re = out[:B, :half]
    im = out[:B, half_pad:half_pad + half]
    return jax.lax.complex(re, im)  # complex64, matches torch.fft.fft on f32


def fft_layer(x):
    """Pallas equivalent of FFT_Layer.forward: torch.fft.fft(X)[:, :N//2]."""
    B, N = x.shape
    half = N // 2
    tm_t, tn_t, tk_t, tm_floor, vmem_limit = _chip_config()

    # Padded / tiled geometry: everything (8,128)-aligned, minimal padding.
    half_pad = _round_up(max(half, 1), 128)
    W2 = 2 * half_pad
    K_pad = _round_up(N, 128)
    tk = _pick_divisor_tile(K_pad, tk_t)
    tn = _pick_divisor_tile(W2, tn_t)
    tm = _pick_tm(B, tm_t, tm_floor)
    B_pad = _round_up(B, tm)

    # Megacore: guarantee >= 2 blocks on a "parallel" axis so both TCs (v7x)
    # get work; halving tn keeps it a multiple of 128 (W2 is a multiple of 256).
    if (B_pad // tm) == 1 and (W2 // tn) == 1 and tn >= 256:
        tn //= 2

    w = _fused_dft_basis(N, half, K_pad, half_pad)
    return _fft_matmul(
        x, w,
        B_pad=B_pad, K_pad=K_pad, half=half, half_pad=half_pad,
        tm=tm, tn=tn, tk=tk, vmem_limit=vmem_limit,
    )


if __name__ == "__main__":
    key = jax.random.PRNGKey(0)
    B, N = 8, 16  # (batch, in_units); half = 8
    x = jax.random.normal(key, (B, N), dtype=jnp.float32)

    out = jax.block_until_ready(fft_layer(x))

    # Reference: same semantics as torch.fft.fft(X)[:, :half].
    # Tolerance reflects bf16 operand streaming with f32 accumulation.
    ref = np.fft.fft(np.asarray(x, dtype=np.float64), axis=1)[:, : N // 2]
    np.testing.assert_allclose(np.asarray(out), ref, rtol=5e-2, atol=5e-2)

    print("KERNEL_OK")
</pallas_src>

<mosaic_0001>
module attributes {stable_mosaic.version = 11 : i64} {
  func.func @_dft_matmul_kernel(%arg0: i32, %arg1: i32, %arg2: i32, %arg3: memref<256x128xbf16, #tpu.memory_space<vmem>>, %arg4: memref<128x128xbf16, #tpu.memory_space<vmem>>, %arg5: memref<256x128xf32, #tpu.memory_space<vmem>>) attributes {dimension_semantics = [#tpu.dimension_semantics<parallel>, #tpu.dimension_semantics<parallel>, #tpu.dimension_semantics<arbitrary>], iteration_bounds = array<i64: 1, 2, 1>, scalar_prefetch = 0 : i64, scratch_operands = 0 : i64, tpu.core_type = #tpu.core_type<tc>, window_params = [{transform_indices = @transform_0, window_bounds = array<i64: 256, 128>}, {transform_indices = @transform_1, window_bounds = array<i64: 128, 128>}, {transform_indices = @transform_2, window_bounds = array<i64: 256, 128>}]} {
    %c0_i32 = arith.constant 0 : i32
    %0 = arith.cmpi eq, %arg2, %c0_i32 : i32
    %1 = arith.extui %0 : i1 to i32
    %c0_i32_0 = arith.constant 0 : i32
    %2 = arith.cmpi ne, %1, %c0_i32_0 : i32
    scf.if %2 {
      %cst_8 = arith.constant 0.000000e+00 : f32
      %9 = vector.broadcast %cst_8 : f32 to vector<256x128xf32>
      %c0_9 = arith.constant 0 : index
      %c0_10 = arith.constant 0 : index
      %10 = vector.load %arg5[%c0_9, %c0_10] : memref<256x128xf32, #tpu.memory_space<vmem>>, vector<256x128xf32>
      tpu.vector_store %arg5[%c0_9, %c0_10], %9 {strides = array<i32>} : memref<256x128xf32, #tpu.memory_space<vmem>>, vector<256x128xf32>,
    } else {
    }
    %c0 = arith.constant 0 : index
    %c0_1 = arith.constant 0 : index
    %3 = vector.load %arg5[%c0, %c0_1] : memref<256x128xf32, #tpu.memory_space<vmem>>, vector<256x128xf32>
    %c0_2 = arith.constant 0 : index
    %c0_3 = arith.constant 0 : index
    %4 = vector.load %arg3[%c0_2, %c0_3] : memref<256x128xbf16, #tpu.memory_space<vmem>>, vector<256x128xbf16>
    %c0_4 = arith.constant 0 : index
    %c0_5 = arith.constant 0 : index
    %5 = vector.load %arg4[%c0_4, %c0_5] : memref<128x128xbf16, #tpu.memory_space<vmem>>, vector<128x128xbf16>
    %cst = arith.constant dense<0.000000e+00> : vector<256x128xf32>
    %6 = tpu.matmul %4, %5, %cst {dimension_numbers = #tpu.dot_dimension_numbers<[1], [0], [0], [1], [0, 0, 1, 1], [], []>} : vector<256x128xbf16>, vector<128x128xbf16>, vector<256x128xf32> -> vector<256x128xf32>
    %7 = arith.addf %3, %6 : vector<256x128xf32>
    %c0_6 = arith.constant 0 : index
    %c0_7 = arith.constant 0 : index
    %8 = vector.load %arg5[%c0_6, %c0_7] : memref<256x128xf32, #tpu.memory_space<vmem>>, vector<256x128xf32>
    tpu.vector_store %arg5[%c0_6, %c0_7], %7 {strides = array<i32>} : memref<256x128xf32, #tpu.memory_space<vmem>>, vector<256x128xf32>,
    return
  }
  func.func @transform_0(%arg0: i32, %arg1: i32, %arg2: i32) -> (i32, i32) {
    %c0_i32 = arith.constant 0 : i32
    return %arg0, %arg2 : i32, i32
  }
  func.func @transform_1(%arg0: i32, %arg1: i32, %arg2: i32) -> (i32, i32) {
    %c0_i32 = arith.constant 0 : i32
    return %arg2, %arg1 : i32, i32
  }
  func.func @transform_2(%arg0: i32, %arg1: i32, %arg2: i32) -> (i32, i32) {
    %c0_i32 = arith.constant 0 : i32
    return %arg0, %arg1 : i32, i32
  }
}

</mosaic_0001>

<llo_original>
// kernel: custom-call
$region0: #{custom-call}
  %s0 = inlined_call_operand.vmem [shape: f32[8,8], index: 0, kind: input, shape index: {}]
  %s1 = inlined_call_operand.vmem [shape: f32[8,8], index: 1, kind: input, shape index: {}]
  %s2 = inlined_call_operand.hbm [shape: c64[8,8], index: 2, kind: output, shape index: {}]
  %s3 = scalar_lea.hbm %s2, 128
  $region1: #{custom-call} parent=0
    #allocation0 [shape = 's32[1]{0}', space=sflag, size = 0x4, scoped, tag = 'scoped memory for custom-call']
    %4 = vsyncpa [#allocation0], 0
    %s5 = sshll.u32 %s0, 4
    %s6 = int_to_ptr.vmem [resolvable:$true] %s5
    %8 = dma.vmem_to_hbm [thread:$0]  %s6, 128, %s2, [#allocation0]
    %9 = dma.done [#allocation0], 128
    %10 = vsyncpa [#allocation0], 1
  $region2: #{custom-call} parent=0
    #allocation1 [shape = 's32[1]{0}', space=sflag, size = 0x4, scoped, tag = 'scoped memory for custom-call']
    %11 = vsyncpa [#allocation1], 0
    %s12 = sshll.u32 %s1, 4
    %s13 = int_to_ptr.vmem [resolvable:$true] %s12
    %15 = dma.vmem_to_hbm [thread:$0]  %s13, 128, %s3, [#allocation1]
    %16 = dma.done [#allocation1], 128
    %17 = vsyncpa [#allocation1], 1

// kernel: _fft_matmul.1
$region0: #{_fft_matmul.1}
  #allocation0 [shape = 'u32[]', space=smem, size = 0x4, offset = 0x4, fixed_abs, tag = 'smem constant byte address 0x4 - core index']
  #allocation1 [shape = 'u32[144,128]{1,0:T(1,128)}', space=vmem, size = 0x12000, scoped, tag = 'internal scratch']
  %s0 = inlined_call_operand.hbm [shape: bf16[256,128], index: 0, kind: input, shape index: {}]
  %s1 = inlined_call_operand.hbm [shape: bf16[128,256], index: 1, kind: input, shape index: {}]
  %s2 = inlined_call_operand.hbm [shape: f32[256,256], index: 2, kind: output, shape index: {}]
  %s3 = sld [smem:[#allocation0]]
  $region53: #{_fft_matmul.1} parent=0
    _
  %s5 = ssub.s32 1, %s3
  %s6 = scalar_select 0, %s5, %s3
  $region1: #{_fft_matmul.1} parent=0
    #allocation2 [shape = 'u8[65536]{0}', space=vmem, size = 0x10000, scoped, tag = 'input window, operand 0, single buffered']
    #allocation3 [shape = 's32[2]{0}', space=sflag, size = 0x8, scoped, tag = 'scoped memory for _fft_matmul.1']
    #allocation4 [shape = 's32[2]{0}', space=sflag, size = 0x8, scoped, tag = 'scoped memory for _fft_matmul.1']
    #allocation5 [shape = 'u8[65536]{0}', space=vmem, size = 0x10000, scoped, tag = 'input window, operand 1']
    #allocation6 [shape = 's32[2]{0}', space=sflag, size = 0x8, scoped, tag = 'scoped memory for _fft_matmul.1']
    #allocation7 [shape = 'u8[262144]{0}', space=vmem, size = 0x40000, scoped, tag = 'output window, operand 0']
    %7 = vsyncpa [#allocation3], 0
    %8 = vsyncpa [#allocation6], 0
    %s9 = scalar_lea.sflag [#allocation6], 1
    %10 = vsyncpa %s9, 0
    %11 = vsyncpa [#allocation4], 0
    %s12 = scalar_lea.sflag [#allocation4], 1
    %13 = vsyncpa %s12, 0
    loop: start=0, step=1, limit=4
    $region2: #{_fft_matmul.1} parent=1 // loop_pre_header
      _
    $region3: #{_fft_matmul.1} parent=1 // loop_header
      %s15 = sphi 0, %s19
      %p16 = scmp.ge.s32.totalorder %s15, 4
      %s22 = sphi 0, %s41
      %s23 = sphi 0, %s37
      %s24 = sphi 0, %s33
      %s25 = sphi 0, %s22
      %s26 = sphi 0, %s23
      %s27 = sphi 0, %s24
      %s28 = sphi 0, %s25
      %s29 = sphi 0, %s26
      %s30 = sphi 0, %s27
      %s46 = sphi 0, %s48
      %s49 = sphi 0, %s46
      %s50 = sphi 0, %s49
      %s66 = sphi 0, %s50
      %s74 = sphi 0, %s76
      %s77 = sphi 0, %s74
      %s78 = sphi 0, %s77
      %s94 = sphi 0, %s78
      %s102 = sphi 0, %s104
      %s105 = sphi 0, %s102
      %s106 = sphi 0, %s105
      %s122 = sphi 0, %s106
    $region4: #{_fft_matmul.1} parent=1 // loop_header_branch
      %18 = sbr.rel (%p16) target = $region8
    $region5: #{_fft_matmul.1} parent=1 // loop_body
      %s20 = ssub.s32 %s15, 1
      %s21 = ssub.s32 %s15, 2
      %s31 = sadd.s32 1, %s24
      %p32 = scmp.ge.s32.totalorder %s31, 1
      %s33 = scalar_select %p32, 0, %s31
      %s34 = sadd.s32 1, %s23
      %s35 = scalar_select %p32, %s34, %s23
      %p36 = scmp.ge.s32.totalorder %s35, 2
      %s37 = scalar_select %p36, 0, %s35
      %s38 = sadd.s32 1, %s22
      %s39 = scalar_select %p36, %s38, %s22
      %p40 = scmp.ge.s32.totalorder %s39, 1
      %s41 = scalar_select %p40, 0, %s39
      %s42 = ssub.s32 %s22, %s41
      %s43 = ssub.s32 %s24, %s33
      %s44 = sor.u32 %s42, %s43
      %p45 = scmp.eq.s32.totalorder %s44, 0
      %s47 = sadd.s32 %s46, 1
      %s48 = scalar_select %p45, %s46, %s47
      %p51 = pneg %p45
      %p52 = scmp.eq.s32.totalorder %s15, 1
      %p53 = por %p51, %p52
      %p54 = scmp.ne.s32.totalorder %s46, %s49
      %p55 = scmp.eq.s32.totalorder %s15, 0
      %p56 = por %p54, %p55
      %p57 = scmp.ne.s32.totalorder %s46, %s49
      %p58 = scmp.eq.s32.totalorder %s20, 1
      %p59 = por %p57, %p58
      %p60 = scmp.ne.s32.totalorder %s49, %s50
      %p61 = scmp.eq.s32.totalorder %s20, 0
      %p62 = por %p60, %p61
      %p63 = scmp.ne.s32.totalorder %s49, %s50
      %p64 = scmp.eq.s32.totalorder %s21, 1
      %p65 = por %p63, %p64
      %p67 = scmp.ne.s32.totalorder %s50, %s66
      %p68 = scmp.eq.s32.totalorder %s21, 0
      %p69 = por %p67, %p68
      %s70 = ssub.s32 %s24, %s33
      %s71 = ssub.s32 %s23, %s37
      %s72 = sor.u32 %s70, %s71
      %p73 = scmp.eq.s32.totalorder %s72, 0
      %s75 = sadd.s32 %s74, 1
      %s76 = scalar_select %p73, %s74, %s75
      %p79 = pneg %p73
      %p80 = scmp.eq.s32.totalorder %s15, 1
      %p81 = por %p79, %p80
      %p82 = scmp.ne.s32.totalorder %s74, %s77
      %p83 = scmp.eq.s32.totalorder %s15, 0
      %p84 = por %p82, %p83
      %p85 = scmp.ne.s32.totalorder %s74, %s77
      %p86 = scmp.eq.s32.totalorder %s20, 1
      %p87 = por %p85, %p86
      %p88 = scmp.ne.s32.totalorder %s77, %s78
      %p89 = scmp.eq.s32.totalorder %s20, 0
      %p90 = por %p88, %p89
      %p91 = scmp.ne.s32.totalorder %s77, %s78
      %p92 = scmp.eq.s32.totalorder %s21, 1
      %p93 = por %p91, %p92
      %p95 = scmp.ne.s32.totalorder %s78, %s94
      %p96 = scmp.eq.s32.totalorder %s21, 0
      %p97 = por %p95, %p96
      %s98 = ssub.s32 %s22, %s41
      %s99 = ssub.s32 %s23, %s37
      %s100 = sor.u32 %s98, %s99
      %p101 = scmp.eq.s32.totalorder %s100, 0
      %s103 = sadd.s32 %s102, 1
      %s104 = scalar_select %p101, %s102, %s103
      %p107 = pneg %p101
      %p108 = scmp.eq.s32.totalorder %s15, 1
      %p109 = por %p107, %p108
      %p110 = scmp.ne.s32.totalorder %s102, %s105
      %p111 = scmp.eq.s32.totalorder %s15, 0
      %p112 = por %p110, %p111
      %p113 = scmp.ne.s32.totalorder %s102, %s105
      %p114 = scmp.eq.s32.totalorder %s20, 1
      %p115 = por %p113, %p114
      %p116 = scmp.ne.s32.totalorder %s105, %s106
      %p117 = scmp.eq.s32.totalorder %s20, 0
      %p118 = por %p116, %p117
      %p119 = scmp.ne.s32.totalorder %s105, %s106
      %p120 = scmp.eq.s32.totalorder %s21, 1
      %p121 = por %p119, %p120
      %p123 = scmp.ne.s32.totalorder %s106, %s122
      %p124 = scmp.eq.s32.totalorder %s21, 0
      %p125 = por %p123, %p124
      %p126 = scmp.le.s32.totalorder 1, %s15
      %p127 = scmp.lt.s32.totalorder %s15, 3
      %p128 = pnand %p126, %p127
      %p129 = pneg %p128
      // Predicated region
      $region9: #{_fft_matmul.1} parent=5 // pred_check
        _
      $region10: #{_fft_matmul.1} parent=5 // pred_check_branch
        %131 = sbr.rel (%p128) target = $region12
      $region11: #{_fft_matmul.1} parent=5 // pred_region
        %s132 = ssub.s32 %s15, 1
        // Predicated region
        $region13: #{_fft_matmul.1} parent=11 // pred_check
          %p133 = pneg %p62
        $region14: #{_fft_matmul.1} parent=11 // pred_check_branch
          %135 = sbr.rel (%p133) target = $region16
        $region15: #{_fft_matmul.1} parent=11 // pred_region
          %s136 = smul.u32 32, %s25
          %s138 = ssub.s32 2048, 2048
          %139 = vsyncadd [#allocation3], %s138
          %s140 = sadd.s32 %s27, %s136
          %s141 = smul.addr %s140, 64
          %s142 = scalar_lea.hbm %s0, %s141
          %s143 = sshll.u32 [#allocation2], 4
          %s144 = int_to_ptr.vmem [resolvable:$true] %s143
          %149 = dma.hbm_to_vmem [thread:$0]  %s142, 2048, %s144, [#allocation3], 64, 64, 4
        $region16: #{_fft_matmul.1} parent=11 // pred_fallthru
          _
      $region12: #{_fft_matmul.1} parent=5 // pred_fallthru
        _
      %p150 = scmp.lt.s32.totalorder %s15, 2
      // Predicated region
      $region17: #{_fft_matmul.1} parent=5 // pred_check
        %p151 = pneg %p150
      $region18: #{_fft_matmul.1} parent=5 // pred_check_branch
        %153 = sbr.rel (%p151) target = $region20
      $region19: #{_fft_matmul.1} parent=5 // pred_region
        // Predicated region
        $region21: #{_fft_matmul.1} parent=19 // pred_check
          %p154 = pneg %p84
        $region22: #{_fft_matmul.1} parent=19 // pred_check_branch
          %156 = sbr.rel (%p154) target = $region24
        $region23: #{_fft_matmul.1} parent=19 // pred_region
          %s157 = sand.u32 %s74, 1
          %s158 = scalar_lea.sflag [#allocation6], %s157
          %s159 = sand.u32 %s74, 1
          %s160 = smul.addr %s159, 64
          %s161 = scalar_lea.vmem [#allocation5], %s160
          %s162 = smul.u32 16, %s24
          %s164 = ssub.s32 1024, 1024
          %165 = vsyncadd %s158, %s164
          %s166 = smul.addr %s162, 2
          %s167 = sadd.s32 %s23, %s166
          %s168 = smul.addr %s167, 64
          %s169 = scalar_lea.hbm %s1, %s168
          %s170 = sshll.u32 %s161, 4
          %s171 = int_to_ptr.vmem [resolvable:$true] %s170
          %176 = dma.hbm_to_vmem [thread:$0]  %s169, 1024, %s171, %s158, 128, 64, 4
        $region24: #{_fft_matmul.1} parent=19 // pred_fallthru
          _
      $region20: #{_fft_matmul.1} parent=5 // pred_fallthru
        _
      %p177 = scmp.le.s32.totalorder 1, %s15
      %p178 = scmp.lt.s32.totalorder %s15, 3
      %p179 = pnand %p177, %p178
      %p180 = pneg %p179
      // Predicated region
      $region25: #{_fft_matmul.1} parent=5 // pred_check
        _
      $region26: #{_fft_matmul.1} parent=5 // pred_check_branch
        %182 = sbr.rel (%p179) target = $region28
      $region27: #{_fft_matmul.1} parent=5 // pred_region
        %s183 = ssub.s32 %s15, 1
        // Predicated region
        $region29: #{_fft_matmul.1} parent=27 // pred_check
          %p184 = pneg %p62
        $region30: #{_fft_matmul.1} parent=27 // pred_check_branch
          %186 = sbr.rel (%p184) target = $region32
        $region31: #{_fft_matmul.1} parent=27 // pred_region
          %187 = dma.done [#allocation3], 2048
        $region32: #{_fft_matmul.1} parent=27 // pred_fallthru
          _
        %s188 = sand.u32 %s77, 1
        %s189 = scalar_lea.sflag [#allocation6], %s188
        %s190 = sand.u32 %s77, 1
        %s191 = smul.addr %s190, 64
        %s192 = scalar_lea.vmem [#allocation5], %s191
        // Predicated region
        $region33: #{_fft_matmul.1} parent=27 // pred_check
          %p193 = pneg %p90
        $region34: #{_fft_matmul.1} parent=27 // pred_check_branch
          %195 = sbr.rel (%p193) target = $region36
        $region35: #{_fft_matmul.1} parent=27 // pred_region
          %196 = dma.done %s189, 1024
        $region36: #{_fft_matmul.1} parent=27 // pred_fallthru
          _
        %p197 = pneg %p62
        %p198 = pneg %p59
        %s199 = sand.u32 %s77, 1
        %s200 = scalar_lea.sflag [#allocation6], %s199
        %s201 = sand.u32 %s77, 1
        %s202 = smul.addr %s201, 64
        %s203 = scalar_lea.vmem [#allocation5], %s202
        %p204 = pneg %p90
        %p205 = pneg %p87
        %p206 = pneg %p118
        %p207 = pneg %p115
        %s208 = sand.u32 %s105, 1
        %s209 = scalar_lea.sflag [#allocation4], %s208
        %s210 = sand.u32 %s105, 1
        %s211 = smul.addr %s210, 256
        %s212 = scalar_lea.vmem [#allocation7], %s211
        %s213 = smul.u32 32, %s25
        %s214 = smul.u32 16, %s27
        %s215 = smul.u32 32, %s25
        %p217 = scmp.eq.s32.totalorder %s27, 0
        // Predicated region
        $region37: #{_fft_matmul.1} parent=27 // pred_check
          %p218 = pneg %p217
        $region38: #{_fft_matmul.1} parent=27 // pred_check_branch
          %220 = sbr.rel (%p218) target = $region40
        $region39: #{_fft_matmul.1} parent=27 // pred_region
          %221 = vst [vmem:[%s212] sm:$0xff] 0.0
          %222 = vst [vmem:[%s212 + $0x8] sm:$0xff] 0.0
          %223 = vst [vmem:[%s212 + $0x10] sm:$0xff] 0.0
          %224 = vst [vmem:[%s212 + $0x18] sm:$0xff] 0.0
          %225 = vst [vmem:[%s212 + $0x20] sm:$0xff] 0.0
          %226 = vst [vmem:[%s212 + $0x28] sm:$0xff] 0.0
          %227 = vst [vmem:[%s212 + $0x30] sm:$0xff] 0.0
          %228 = vst [vmem:[%s212 + $0x38] sm:$0xff] 0.0
          %229 = vst [vmem:[%s212 + $0x40] sm:$0xff] 0.0
          %230 = vst [vmem:[%s212 + $0x48] sm:$0xff] 0.0
          %231 = vst [vmem:[%s212 + $0x50] sm:$0xff] 0.0
          %232 = vst [vmem:[%s212 + $0x58] sm:$0xff] 0.0
          %233 = vst [vmem:[%s212 + $0x60] sm:$0xff] 0.0
          %234 = vst [vmem:[%s212 + $0x68] sm:$0xff] 0.0
          %235 = vst [vmem:[%s212 + $0x70] sm:$0xff] 0.0
          %236 = vst [vmem:[%s212 + $0x78] sm:$0xff] 0.0
          %237 = vst [vmem:[%s212 + $0x80] sm:$0xff] 0.0
          %238 = vst [vmem:[%s212 + $0x88] sm:$0xff] 0.0
          %239 = vst [vmem:[%s212 + $0x90] sm:$0xff] 0.0
          %240 = vst [vmem:[%s212 + $0x98] sm:$0xff] 0.0
          %241 = vst [vmem:[%s212 + $0xa0] sm:$0xff] 0.0
          %242 = vst [vmem:[%s212 + $0xa8] sm:$0xff] 0.0
          %243 = vst [vmem:[%s212 + $0xb0] sm:$0xff] 0.0
          %244 = vst [vmem:[%s212 + $0xb8] sm:$0xff] 0.0
          %245 = vst [vmem:[%s212 + $0xc0] sm:$0xff] 0.0
          %246 = vst [vmem:[%s212 + $0xc8] sm:$0xff] 0.0
          %247 = vst [vmem:[%s212 + $0xd0] sm:$0xff] 0.0
          %248 = vst [vmem:[%s212 + $0xd8] sm:$0xff] 0.0
          %249 = vst [vmem:[%s212 + $0xe0] sm:$0xff] 0.0
          %250 = vst [vmem:[%s212 + $0xe8] sm:$0xff] 0.0
          %251 = vst [vmem:[%s212 + $0xf0] sm:$0xff] 0.0
          %252 = vst [vmem:[%s212 + $0xf8] sm:$0xff] 0.0
        $region40: #{_fft_matmul.1} parent=27 // pred_fallthru
          _
        %v253 = vld [vmem:[%s212] sm:$0xff]
        %v254 = vld [vmem:[%s212 + $0x8] sm:$0xff]
        %v255 = vld [vmem:[%s212 + $0x10] sm:$0xff]
        %v256 = vld [vmem:[%s212 + $0x18] sm:$0xff]
        %v257 = vld [vmem:[%s212 + $0x20] sm:$0xff]
        %v258 = vld [vmem:[%s212 + $0x28] sm:$0xff]
        %v259 = vld [vmem:[%s212 + $0x30] sm:$0xff]
        %v260 = vld [vmem:[%s212 + $0x38] sm:$0xff]
        %v261 = vld [vmem:[%s212 + $0x40] sm:$0xff]
        %v262 = vld [vmem:[%s212 + $0x48] sm:$0xff]
        %v263 = vld [vmem:[%s212 + $0x50] sm:$0xff]
        %v264 = vld [vmem:[%s212 + $0x58] sm:$0xff]
        %v265 = vld [vmem:[%s212 + $0x60] sm:$0xff]
        %v266 = vld [vmem:[%s212 + $0x68] sm:$0xff]
        %v267 = vld [vmem:[%s212 + $0x70] sm:$0xff]
        %v268 = vld [vmem:[%s212 + $0x78] sm:$0xff]
        %v269 = vld [vmem:[%s212 + $0x80] sm:$0xff]
        %v270 = vld [vmem:[%s212 + $0x88] sm:$0xff]
        %v271 = vld [vmem:[%s212 + $0x90] sm:$0xff]
        %v272 = vld [vmem:[%s212 + $0x98] sm:$0xff]
        %v273 = vld [vmem:[%s212 + $0xa0] sm:$0xff]
        %v274 = vld [vmem:[%s212 + $0xa8] sm:$0xff]
        %v275 = vld [vmem:[%s212 + $0xb0] sm:$0xff]
        %v276 = vld [vmem:[%s212 + $0xb8] sm:$0xff]
        %v277 = vld [vmem:[%s212 + $0xc0] sm:$0xff]
        %v278 = vld [vmem:[%s212 + $0xc8] sm:$0xff]
        %v279 = vld [vmem:[%s212 + $0xd0] sm:$0xff]
        %v280 = vld [vmem:[%s212 + $0xd8] sm:$0xff]
        %v281 = vld [vmem:[%s212 + $0xe0] sm:$0xff]
        %v282 = vld [vmem:[%s212 + $0xe8] sm:$0xff]
        %v283 = vld [vmem:[%s212 + $0xf0] sm:$0xff]
        %v284 = vld [vmem:[%s212 + $0xf8] sm:$0xff]
        %v285 = vld [vmem:[#allocation2] sm:$0xf]
        %v286 = vld [vmem:[#allocation2 + $0x4] sm:$0xf]
        %v287 = vld [vmem:[#allocation2 + $0x8] sm:$0xf]
        %v288 = vld [vmem:[#allocation2 + $0xc] sm:$0xf]
        %v289 = vld [vmem:[#allocation2 + $0x10] sm:$0xf]
        %v290 = vld [vmem:[#allocation2 + $0x14] sm:$0xf]
        %v291 = vld [vmem:[#allocation2 + $0x18] sm:$0xf]
        %v292 = vld [vmem:[#allocation2 + $0x1c] sm:$0xf]
        %v293 = vld [vmem:[#allocation2 + $0x20] sm:$0xf]
        %v294 = vld [vmem:[#allocation2 + $0x24] sm:$0xf]
        %v295 = vld [vmem:[#allocation2 + $0x28] sm:$0xf]
        %v296 = vld [vmem:[#allocation2 + $0x2c] sm:$0xf]
        %v297 = vld [vmem:[#allocation2 + $0x30] sm:$0xf]
        %v298 = vld [vmem:[#allocation2 + $0x34] sm:$0xf]
        %v299 = vld [vmem:[#allocation2 + $0x38] sm:$0xf]
        %v300 = vld [vmem:[#allocation2 + $0x3c] sm:$0xf]
        %v301 = vld [vmem:[#allocation2 + $0x40] sm:$0xf]
        %v302 = vld [vmem:[#allocation2 + $0x44] sm:$0xf]
        %v303 = vld [vmem:[#allocation2 + $0x48] sm:$0xf]
        %v304 = vld [vmem:[#allocation2 + $0x4c] sm:$0xf]
        %v305 = vld [vmem:[#allocation2 + $0x50] sm:$0xf]
        %v306 = vld [vmem:[#allocation2 + $0x54] sm:$0xf]
        %v307 = vld [vmem:[#allocation2 + $0x58] sm:$0xf]
        %v308 = vld [vmem:[#allocation2 + $0x5c] sm:$0xf]
        %v309 = vld [vmem:[#allocation2 + $0x60] sm:$0xf]
        %v310 = vld [vmem:[#allocation2 + $0x64] sm:$0xf]
        %v311 = vld [vmem:[#allocation2 + $0x68] sm:$0xf]
        %v312 = vld [vmem:[#allocation2 + $0x6c] sm:$0xf]
        %v313 = vld [vmem:[#allocation2 + $0x70] sm:$0xf]
        %v314 = vld [vmem:[#allocation2 + $0x74] sm:$0xf]
        %v315 = vld [vmem:[#allocation2 + $0x78] sm:$0xf]
        %v316 = vld [vmem:[#allocation2 + $0x7c] sm:$0xf]
        %v317 = vld [vmem:[%s192] sm:$0xf]
        %v318 = vld [vmem:[%s192 + $0x4] sm:$0xf]
        %v319 = vld [vmem:[%s192 + $0x8] sm:$0xf]
        %v320 = vld [vmem:[%s192 + $0xc] sm:$0xf]
        %v321 = vld [vmem:[%s192 + $0x10] sm:$0xf]
        %v322 = vld [vmem:[%s192 + $0x14] sm:$0xf]
        %v323 = vld [vmem:[%s192 + $0x18] sm:$0xf]
        %v324 = vld [vmem:[%s192 + $0x1c] sm:$0xf]
        %v325 = vld [vmem:[%s192 + $0x20] sm:$0xf]
        %v326 = vld [vmem:[%s192 + $0x24] sm:$0xf]
        %v327 = vld [vmem:[%s192 + $0x28] sm:$0xf]
        %v328 = vld [vmem:[%s192 + $0x2c] sm:$0xf]
        %v329 = vld [vmem:[%s192 + $0x30] sm:$0xf]
        %v330 = vld [vmem:[%s192 + $0x34] sm:$0xf]
        %v331 = vld [vmem:[%s192 + $0x38] sm:$0xf]
        %v332 = vld [vmem:[%s192 + $0x3c] sm:$0xf]
        %v365 = vunpack.c.l.b16 %v285
        %v366 = vunpack.c.l.b16 %v286
        %v367 = vunpack.c.l.b16 %v287
        %v368 = vunpack.c.l.b16 %v288
        %v369 = vunpack.c.l.b16 %v289
        %v370 = vunpack.c.l.b16 %v290
        %v371 = vunpack.c.l.b16 %v291
        %v372 = vunpack.c.l.b16 %v292
        %v373 = vunpack.c.l.b16 %v293
        %v374 = vunpack.c.l.b16 %v294
        %v375 = vunpack.c.l.b16 %v295
        %v376 = vunpack.c.l.b16 %v296
        %v377 = vunpack.c.l.b16 %v297
        %v378 = vunpack.c.l.b16 %v298
        %v379 = vunpack.c.l.b16 %v299
        %v380 = vunpack.c.l.b16 %v300
        %v381 = vunpack.c.l.b16 %v301
        %v382 = vunpack.c.l.b16 %v302
        %v383 = vunpack.c.l.b16 %v303
        %v384 = vunpack.c.l.b16 %v304
        %v385 = vunpack.c.l.b16 %v305
        %v386 = vunpack.c.l.b16 %v306
        %v387 = vunpack.c.l.b16 %v307
        %v388 = vunpack.c.l.b16 %v308
        %v389 = vunpack.c.l.b16 %v309
        %v390 = vunpack.c.l.b16 %v310
        %v391 = vunpack.c.l.b16 %v311
        %v392 = vunpack.c.l.b16 %v312
        %v393 = vunpack.c.l.b16 %v313
        %v394 = vunpack.c.l.b16 %v314
        %v395 = vunpack.c.l.b16 %v315
        %v396 = vunpack.c.l.b16 %v316
        %v397 = vpack.c.b16 %v366, %v365
        %v398 = vpack.c.b16 %v368, %v367
        %v399 = vpack.c.b16 %v370, %v369
        %v400 = vpack.c.b16 %v372, %v371
        %v401 = vpack.c.b16 %v374, %v373
        %v402 = vpack.c.b16 %v376, %v375
        %v403 = vpack.c.b16 %v378, %v377
        %v404 = vpack.c.b16 %v380, %v379
        %v405 = vpack.c.b16 %v382, %v381
        %v406 = vpack.c.b16 %v384, %v383
        %v407 = vpack.c.b16 %v386, %v385
        %v408 = vpack.c.b16 %v388, %v387
        %v409 = vpack.c.b16 %v390, %v389
        %v410 = vpack.c.b16 %v392, %v391
        %v411 = vpack.c.b16 %v394, %v393
        %v412 = vpack.c.b16 %v396, %v395
        %v445 = vunpack.c.l.b16 %v317
        %v446 = vunpack.c.l.b16 %v318
        %v447 = vunpack.c.l.b16 %v319
        %v448 = vunpack.c.l.b16 %v320
        %v449 = vunpack.c.l.b16 %v321
        %v450 = vunpack.c.l.b16 %v322
        %v451 = vunpack.c.l.b16 %v323
        %v452 = vunpack.c.l.b16 %v324
        %v453 = vunpack.c.l.b16 %v325
        %v454 = vunpack.c.l.b16 %v326
        %v455 = vunpack.c.l.b16 %v327
        %v456 = vunpack.c.l.b16 %v328
        %v457 = vunpack.c.l.b16 %v329
        %v458 = vunpack.c.l.b16 %v330
        %v459 = vunpack.c.l.b16 %v331
        %v460 = vunpack.c.l.b16 %v332
        %v461 = vpack.c.b16 %v446, %v445
        %v462 = vpack.c.b16 %v448, %v447
        %v463 = vpack.c.b16 %v450, %v449
        %v464 = vpack.c.b16 %v452, %v451
        %v465 = vpack.c.b16 %v454, %v453
        %v466 = vpack.c.b16 %v456, %v455
        %v467 = vpack.c.b16 %v458, %v457
        %v468 = vpack.c.b16 %v460, %v459
        %477 = vmatprep.subr.bf16.mxu0 0
        %478 = vmatpush1.bf16.msra.mxu0 %v461
        %479 = vmatprep.subr.bf16.mxu0 0
        %480 = vmatpush1.bf16.msra.mxu0 %v462
        %481 = vmatprep.subr.bf16.mxu0 0
        %482 = vmatpush1.bf16.msra.mxu0 %v463
        %483 = vmatprep.subr.bf16.mxu0 0
        %484 = vmatpush1.bf16.msra.mxu0 %v464
        %485 = vmatprep.subr.bf16.mxu0 0
        %486 = vmatpush1.bf16.msra.mxu0 %v465
        %487 = vmatprep.subr.bf16.mxu0 0
        %488 = vmatpush1.bf16.msra.mxu0 %v466
        %489 = vmatprep.subr.bf16.mxu0 0
        %490 = vmatpush1.bf16.msra.mxu0 %v467
        %491 = vmatprep.subr.bf16.mxu0 0
        %492 = vmatpush1.bf16.msra.mxu0 %v468
        %493 = vmatprep.subr.bf16.mxu0 0
        %494 = vmatpush1.bf16.msra.mxu0 0
        %495 = vmatprep.subr.bf16.mxu0 0
        %496 = vmatpush1.bf16.msra.mxu0 0
        %497 = vmatprep.subr.bf16.mxu0 0
        %498 = vmatpush1.bf16.msra.mxu0 0
        %499 = vmatprep.subr.bf16.mxu0 0
        %500 = vmatpush1.bf16.msra.mxu0 0
        %501 = vmatprep.subr.bf16.mxu0 0
        %502 = vmatpush1.bf16.msra.mxu0 0
        %503 = vmatprep.subr.bf16.mxu0 0
        %504 = vmatpush1.bf16.msra.mxu0 0
        %505 = vmatprep.subr.bf16.mxu0 0
        %506 = vmatpush1.bf16.msra.mxu0 0
        %507 = vmatprep.subr.bf16.mxu0 0
        %508 = vmatpush1.bf16.msra.mxu0 0
        %509 = vmatprep.mubr.bf16.mxu0 0
        %510 = vmatmul.mubr.bf16.gmra.mrb[0].mxu0 %v397
        %v511 = vpop.f32.mrb[0].mxu0
        %v512 = vadd.f32 0.0, %v511
        %v513 = vpop.f32.mrb[0].mxu0
        %v514 = vpop.f32.mrb[0].mxu0
        %v515 = vadd.f32 0.0, %v514
        %v516 = vpop.f32.mrb[0].mxu0
        %517 = vmatprep.mubr.bf16.mxu0 0
        %518 = vmatmul.mubr.bf16.gmra.mrb[0].mxu0 %v398
        %v519 = vpop.f32.mrb[0].mxu0
        %v520 = vadd.f32 0.0, %v519
        %v521 = vpop.f32.mrb[0].mxu0
        %v522 = vpop.f32.mrb[0].mxu0
        %v523 = vadd.f32 0.0, %v522
        %v524 = vpop.f32.mrb[0].mxu0
        %525 = vmatprep.mubr.bf16.mxu0 0
        %526 = vmatmul.mubr.bf16.gmra.mrb[0].mxu0 %v399
        %v527 = vpop.f32.mrb[0].mxu0
        %v528 = vadd.f32 0.0, %v527
        %v529 = vpop.f32.mrb[0].mxu0
        %v530 = vpop.f32.mrb[0].mxu0
        %v531 = vadd.f32 0.0, %v530
        %v532 = vpop.f32.mrb[0].mxu0
        %533 = vmatprep.mubr.bf16.mxu0 0
        %534 = vmatmul.mubr.bf16.gmra.mrb[0].mxu0 %v400
        %v535 = vpop.f32.mrb[0].mxu0
        %v536 = vadd.f32 0.0, %v535
        %v537 = vpop.f32.mrb[0].mxu0
        %v538 = vpop.f32.mrb[0].mxu0
        %v539 = vadd.f32 0.0, %v538
        %v540 = vpop.f32.mrb[0].mxu0
        %541 = vmatprep.mubr.bf16.mxu0 0
        %542 = vmatmul.mubr.bf16.gmra.mrb[0].mxu0 %v401
        %v543 = vpop.f32.mrb[0].mxu0
        %v544 = vadd.f32 0.0, %v543
        %v545 = vpop.f32.mrb[0].mxu0
        %v546 = vpop.f32.mrb[0].mxu0
        %v547 = vadd.f32 0.0, %v546
        %v548 = vpop.f32.mrb[0].mxu0
        %549 = vmatprep.mubr.bf16.mxu0 0
        %550 = vmatmul.mubr.bf16.gmra.mrb[0].mxu0 %v402
        %v551 = vpop.f32.mrb[0].mxu0
        %v552 = vadd.f32 0.0, %v551
        %v553 = vpop.f32.mrb[0].mxu0
        %v554 = vpop.f32.mrb[0].mxu0
        %v555 = vadd.f32 0.0, %v554
        %v556 = vpop.f32.mrb[0].mxu0
        %557 = vmatprep.mubr.bf16.mxu0 0
        %558 = vmatmul.mubr.bf16.gmra.mrb[0].mxu0 %v403
        %v559 = vpop.f32.mrb[0].mxu0
        %v560 = vadd.f32 0.0, %v559
        %v561 = vpop.f32.mrb[0].mxu0
        %v562 = vpop.f32.mrb[0].mxu0
        %v563 = vadd.f32 0.0, %v562
        %v564 = vpop.f32.mrb[0].mxu0
        %565 = vmatprep.mubr.bf16.mxu0 0
        %566 = vmatmul.mubr.bf16.gmra.mrb[0].mxu0 %v404
        %v567 = vpop.f32.mrb[0].mxu0
        %v568 = vadd.f32 0.0, %v567
        %v569 = vpop.f32.mrb[0].mxu0
        %v570 = vpop.f32.mrb[0].mxu0
        %v571 = vadd.f32 0.0, %v570
        %v572 = vpop.f32.mrb[0].mxu0
        %573 = vmatprep.mubr.bf16.mxu0 0
        %574 = vmatmul.mubr.bf16.gmra.mrb[0].mxu0 %v405
        %v575 = vpop.f32.mrb[0].mxu0
        %v576 = vadd.f32 0.0, %v575
        %v577 = vpop.f32.mrb[0].mxu0
        %v578 = vpop.f32.mrb[0].mxu0
        %v579 = vadd.f32 0.0, %v578
        %v580 = vpop.f32.mrb[0].mxu0
        %581 = vmatprep.mubr.bf16.mxu0 0
        %582 = vmatmul.mubr.bf16.gmra.mrb[0].mxu0 %v406
        %v583 = vpop.f32.mrb[0].mxu0
        %v584 = vadd.f32 0.0, %v583
        %v585 = vpop.f32.mrb[0].mxu0
        %v586 = vpop.f32.mrb[0].mxu0
        %v587 = vadd.f32 0.0, %v586
        %v588 = vpop.f32.mrb[0].mxu0
        %589 = vmatprep.mubr.bf16.mxu0 0
        %590 = vmatmul.mubr.bf16.gmra.mrb[0].mxu0 %v407
        %v591 = vpop.f32.mrb[0].mxu0
        %v592 = vadd.f32 0.0, %v591
        %v593 = vpop.f32.mrb[0].mxu0
        %v594 = vpop.f32.mrb[0].mxu0
        %v595 = vadd.f32 0.0, %v594
        %v596 = vpop.f32.mrb[0].mxu0
        %597 = vmatprep.mubr.bf16.mxu0 0
        %598 = vmatmul.mubr.bf16.gmra.mrb[0].mxu0 %v408
        %v599 = vpop.f32.mrb[0].mxu0
        %v600 = vadd.f32 0.0, %v599
        %v601 = vpop.f32.mrb[0].mxu0
        %v602 = vpop.f32.mrb[0].mxu0
        %v603 = vadd.f32 0.0, %v602
        %v604 = vpop.f32.mrb[0].mxu0
        %605 = vmatprep.mubr.bf16.mxu0 0
        %606 = vmatmul.mubr.bf16.gmra.mrb[0].mxu0 %v409
        %v607 = vpop.f32.mrb[0].mxu0
        %v608 = vadd.f32 0.0, %v607
        %v609 = vpop.f32.mrb[0].mxu0
        %v610 = vpop.f32.mrb[0].mxu0
        %v611 = vadd.f32 0.0, %v610
        %v612 = vpop.f32.mrb[0].mxu0
        %613 = vmatprep.mubr.bf16.mxu0 0
        %614 = vmatmul.mubr.bf16.gmra.mrb[0].mxu0 %v410
        %v615 = vpop.f32.mrb[0].mxu0
        %v616 = vadd.f32 0.0, %v615
        %v617 = vpop.f32.mrb[0].mxu0
        %v618 = vpop.f32.mrb[0].mxu0
        %v619 = vadd.f32 0.0, %v618
        %v620 = vpop.f32.mrb[0].mxu0
        %621 = vmatprep.mubr.bf16.mxu0 0
        %622 = vmatmul.mubr.bf16.gmra.mrb[0].mxu0 %v411
        %v623 = vpop.f32.mrb[0].mxu0
        %v624 = vadd.f32 0.0, %v623
        %v625 = vpop.f32.mrb[0].mxu0
        %v626 = vpop.f32.mrb[0].mxu0
        %v627 = vadd.f32 0.0, %v626
        %v628 = vpop.f32.mrb[0].mxu0
        %629 = vmatprep.mubr.bf16.mxu0 0
        %630 = vmatmul.mubr.bf16.gmra.mrb[0].mxu0 %v412
        %v631 = vpop.f32.mrb[0].mxu0
        %v632 = vadd.f32 0.0, %v631
        %v633 = vpop.f32.mrb[0].mxu0
        %v634 = vpop.f32.mrb[0].mxu0
        %v635 = vadd.f32 0.0, %v634
        %v636 = vpop.f32.mrb[0].mxu0
        %637 = vdwg.mxu0
        %v638 = vadd.f32 %v253, %v512
        %v639 = vadd.f32 %v254, %v515
        %v640 = vadd.f32 %v255, %v520
        %v641 = vadd.f32 %v256, %v523
        %v642 = vadd.f32 %v257, %v528
        %v643 = vadd.f32 %v258, %v531
        %v644 = vadd.f32 %v259, %v536
        %v645 = vadd.f32 %v260, %v539
        %v646 = vadd.f32 %v261, %v544
        %v647 = vadd.f32 %v262, %v547
        %v648 = vadd.f32 %v263, %v552
        %v649 = vadd.f32 %v264, %v555
        %v650 = vadd.f32 %v265, %v560
        %v651 = vadd.f32 %v266, %v563
        %v652 = vadd.f32 %v267, %v568
        %v653 = vadd.f32 %v268, %v571
        %v654 = vadd.f32 %v269, %v576
        %v655 = vadd.f32 %v270, %v579
        %v656 = vadd.f32 %v271, %v584
        %v657 = vadd.f32 %v272, %v587
        %v658 = vadd.f32 %v273, %v592
        %v659 = vadd.f32 %v274, %v595
        %v660 = vadd.f32 %v275, %v600
        %v661 = vadd.f32 %v276, %v603
        %v662 = vadd.f32 %v277, %v608
        %v663 = vadd.f32 %v278, %v611
        %v664 = vadd.f32 %v279, %v616
        %v665 = vadd.f32 %v280, %v619
        %v666 = vadd.f32 %v281, %v624
        %v667 = vadd.f32 %v282, %v627
        %v668 = vadd.f32 %v283, %v632
        %v669 = vadd.f32 %v284, %v635
        %670 = vst [vmem:[%s212] sm:$0xff] %v638
        %671 = vst [vmem:[%s212 + $0x8] sm:$0xff] %v639
        %672 = vst [vmem:[%s212 + $0x10] sm:$0xff] %v640
        %673 = vst [vmem:[%s212 + $0x18] sm:$0xff] %v641
        %674 = vst [vmem:[%s212 + $0x20] sm:$0xff] %v642
        %675 = vst [vmem:[%s212 + $0x28] sm:$0xff] %v643
        %676 = vst [vmem:[%s212 + $0x30] sm:$0xff] %v644
        %677 = vst [vmem:[%s212 + $0x38] sm:$0xff] %v645
        %678 = vst [vmem:[%s212 + $0x40] sm:$0xff] %v646
        %679 = vst [vmem:[%s212 + $0x48] sm:$0xff] %v647
        %680 = vst [vmem:[%s212 + $0x50] sm:$0xff] %v648
        %681 = vst [vmem:[%s212 + $0x58] sm:$0xff] %v649
        %682 = vst [vmem:[%s212 + $0x60] sm:$0xff] %v650
        %683 = vst [vmem:[%s212 + $0x68] sm:$0xff] %v651
        %684 = vst [vmem:[%s212 + $0x70] sm:$0xff] %v652
        %685 = vst [vmem:[%s212 + $0x78] sm:$0xff] %v653
        %686 = vst [vmem:[%s212 + $0x80] sm:$0xff] %v654
        %687 = vst [vmem:[%s212 + $0x88] sm:$0xff] %v655
        %688 = vst [vmem:[%s212 + $0x90] sm:$0xff] %v656
        %689 = vst [vmem:[%s212 + $0x98] sm:$0xff] %v657
        %690 = vst [vmem:[%s212 + $0xa0] sm:$0xff] %v658
        %691 = vst [vmem:[%s212 + $0xa8] sm:$0xff] %v659
        %692 = vst [vmem:[%s212 + $0xb0] sm:$0xff] %v660
        %693 = vst [vmem:[%s212 + $0xb8] sm:$0xff] %v661
        %694 = vst [vmem:[%s212 + $0xc0] sm:$0xff] %v662
        %695 = vst [vmem:[%s212 + $0xc8] sm:$0xff] %v663
        %696 = vst [vmem:[%s212 + $0xd0] sm:$0xff] %v664
        %697 = vst [vmem:[%s212 + $0xd8] sm:$0xff] %v665
        %698 = vst [vmem:[%s212 + $0xe0] sm:$0xff] %v666
        %699 = vst [vmem:[%s212 + $0xe8] sm:$0xff] %v667
        %700 = vst [vmem:[%s212 + $0xf0] sm:$0xff] %v668
        %701 = vst [vmem:[%s212 + $0xf8] sm:$0xff] %v669
        %s702 = sand.u32 %s105, 1
        %s703 = scalar_lea.sflag [#allocation4], %s702
        %s704 = sand.u32 %s105, 1
        %s705 = smul.addr %s704, 256
        %s706 = scalar_lea.vmem [#allocation7], %s705
        // Predicated region
        $region41: #{_fft_matmul.1} parent=27 // pred_check
          %p707 = pneg %p115
        $region42: #{_fft_matmul.1} parent=27 // pred_check_branch
          %709 = sbr.rel (%p707) target = $region44
        $region43: #{_fft_matmul.1} parent=27 // pred_region
          %s710 = smul.u32 32, %s25
          %s712 = ssub.s32 4096, 4096
          %713 = vsyncadd %s703, %s712
          %s714 = smul.addr %s710, 2
          %s715 = sadd.s32 %s26, %s714
          %s716 = smul.addr %s715, 128
          %s717 = scalar_lea.hbm %s2, %s716
          %s718 = sshll.u32 %s706, 4
          %s719 = int_to_ptr.vmem [resolvable:$true] %s718
          %724 = dma.vmem_to_hbm [thread:$0]  %s719, 4096, %s717, %s703, 128, 256, 8
        $region44: #{_fft_matmul.1} parent=27 // pred_fallthru
          _
      $region28: #{_fft_matmul.1} parent=5 // pred_fallthru
        _
      %p725 = scmp.le.s32.totalorder 2, %s15
      // Predicated region
      $region45: #{_fft_matmul.1} parent=5 // pred_check
        %p726 = pneg %p725
      $region46: #{_fft_matmul.1} parent=5 // pred_check_branch
        %728 = sbr.rel (%p726) target = $region48
      $region47: #{_fft_matmul.1} parent=5 // pred_region
        %s729 = ssub.s32 %s15, 2
        // Predicated region
        $region49: #{_fft_matmul.1} parent=47 // pred_check
          %p730 = pneg %p121
        $region50: #{_fft_matmul.1} parent=47 // pred_check_branch
          %732 = sbr.rel (%p730) target = $region52
        $region51: #{_fft_matmul.1} parent=47 // pred_region
          %s733 = sand.u32 %s106, 1
          %s734 = scalar_lea.sflag [#allocation4], %s733
          %s735 = sand.u32 %s106, 1
          %s736 = smul.addr %s735, 256
          %s737 = scalar_lea.vmem [#allocation7], %s736
          %738 = dma.done %s734, 4096
        $region52: #{_fft_matmul.1} parent=47 // pred_fallthru
          _
      $region48: #{_fft_matmul.1} parent=5 // pred_fallthru
        _
    $region6: #{_fft_matmul.1} parent=1 // loop_footer
      %s19 = sadd.s32 1, %s15
    $region7: #{_fft_matmul.1} parent=1 // loop_footer_branch
      %14 = sbr.rel target = $region3
    $region8: #{_fft_matmul.1} parent=1 // loop_exit
      _
    %739 = vsyncpa [#allocation3], 1
    %s740 = scalar_lea.sflag [#allocation3], 1
    %741 = vsyncpa %s740, 1
    %742 = vsyncpa [#allocation6], 1
    %s743 = scalar_lea.sflag [#allocation6], 1
    %744 = vsyncpa %s743, 1
    %745 = vsyncpa [#allocation4], 1
    %s746 = scalar_lea.sflag [#allocation4], 1
    %747 = vsyncpa %s746, 1

</llo_original>
